<compile_context>
chip_gen: v5e
topology: v5e:2x2
jax: 0.10.0
libtpu: 0.0.40
codegen_flags: <defaults>
</compile_context>

<pallas_src>
import jax
import jax.numpy as jnp
from jax.experimental import pallas as pl
from jax.experimental.pallas import tpu as pltpu

LANE = 128


# ---------------------------------------------------------------------------
# Kernels
# ---------------------------------------------------------------------------
def _project_kernel(x_ref, wl_ref, wr_ref, zl_ref, zr_ref):
    """Prologue: z_l = x @ W_l^T (bf16) and z_r = x @ W_r^T (f32), per row tile."""
    x = x_ref[...]
    zl = jnp.dot(x, wl_ref[...], preferred_element_type=jnp.float32)
    zr = jnp.dot(x, wr_ref[...], preferred_element_type=jnp.float32)
    zl_ref[...] = zl.astype(zl_ref.dtype)
    zr_ref[...] = zr


def _sage_agg_kernel(a_ref, zl_ref, zr_ref, inv_ref, b_ref, o_ref):
    """Grid = (dst-row tiles i, src reduction tiles k); k innermost.

    o_ref's block index is constant along k, so it stays resident in VMEM and
    is used directly as the f32 accumulator (no scratch).
    """
    k = pl.program_id(1)

    @pl.when(k == 0)
    def _init():
        o_ref[...] = jnp.zeros_like(o_ref)

    # Hot loop: aggregate projected neighbor features with raw edge counts.
    o_ref[...] += jnp.dot(a_ref[...], zl_ref[...],
                          preferred_element_type=jnp.float32)

    @pl.when(k == pl.num_programs(1) - 1)
    def _finalize():
        # mean (1/deg, f32), root term, bias, ReLU -- epilogue-only VPU work.
        h = o_ref[...] * inv_ref[...] + zr_ref[...] + b_ref[...]
        o_ref[...] = jnp.maximum(h, 0.0)


def _pick_tile(n, candidates):
    for c in candidates:
        if c <= n and n % c == 0:
            return c
    return n


# ---------------------------------------------------------------------------
# Wrapper
# ---------------------------------------------------------------------------
def simple_sage_forward(x, edge_index, w_l, b_l, w_r):
    """x: (N, F_in) f32, edge_index: (2, E) int32 [src; dst]."""
    N, F_in = x.shape
    C = w_l.shape[0]

    # --- glue: dense adjacency of raw edge counts (mean applied in epilogue) ---
    # TODO(synk): for sparse graphs (E << N^2) replace this dense O(N^2) scatter
    # with a CSR/edge-list gather formulation (PrefetchScalarGridSpec driving a
    # gather of z_l rows) so cost scales with E.  On v5e/v6e the count matrix
    # could additionally be streamed as int8 (not portable to v7x's MXU); bf16
    # counts are exact only up to 256 parallel edges per (dst, src) pair.
    src, dst = edge_index[0], edge_index[1]
    counts = jnp.zeros((N, N), jnp.float32).at[dst, src].add(1.0)
    deg = jnp.sum(counts, axis=1, keepdims=True)
    inv_deg = 1.0 / jnp.maximum(deg, 1.0)

    # --- padding: nodes and classes to lane-dense multiples of 128 ---
    n_pad = pl.cdiv(N, LANE) * LANE
    c_pad = pl.cdiv(C, LANE) * LANE

    # Prefer >= 2 dst-row tiles when the graph is big enough so the "parallel"
    # row axis splits evenly across v7x's two TensorCores.
    tile_m_target = n_pad // 2 if n_pad >= 2 * LANE else n_pad
    tile_m = _pick_tile(tile_m_target, (512, 256, 128))
    tile_k = _pick_tile(n_pad, (2048, 1024, 512, 256, 128))
    tile_p = _pick_tile(n_pad, (512, 256, 128))

    a_p = jnp.zeros((n_pad, n_pad), jnp.bfloat16).at[:N, :N].set(
        counts.astype(jnp.bfloat16))
    x_p = jnp.zeros((n_pad, F_in), jnp.bfloat16).at[:N, :].set(
        x.astype(jnp.bfloat16))
    wl_p = jnp.zeros((F_in, c_pad), jnp.bfloat16).at[:, :C].set(
        w_l.T.astype(jnp.bfloat16))
    wr_p = jnp.zeros((F_in, c_pad), jnp.bfloat16).at[:, :C].set(
        w_r.T.astype(jnp.bfloat16))
    b_p = jnp.zeros((1, c_pad), jnp.float32).at[0, :C].set(
        b_l.astype(jnp.float32))
    inv_p = jnp.zeros((n_pad, 1), jnp.float32).at[:N, :].set(inv_deg)

    # --- prologue: hoisted projections z_l (bf16) and z_r (f32) ---
    proj_flops = 2 * 2 * n_pad * F_in * c_pad
    proj_bytes = (x_p.size * 2 + wl_p.size * 2 + wr_p.size * 2
                  + n_pad * c_pad * (2 + 4))
    zl, zr = pl.pallas_call(
        _project_kernel,
        out_shape=(jax.ShapeDtypeStruct((n_pad, c_pad), jnp.bfloat16),
                   jax.ShapeDtypeStruct((n_pad, c_pad), jnp.float32)),
        grid_spec=pltpu.PrefetchScalarGridSpec(
            num_scalar_prefetch=0,
            grid=(n_pad // tile_p,),
            in_specs=[
                pl.BlockSpec((tile_p, F_in), lambda i: (i, 0)),   # x rows
                pl.BlockSpec((F_in, c_pad), lambda i: (0, 0)),    # W_l^T (resident)
                pl.BlockSpec((F_in, c_pad), lambda i: (0, 0)),    # W_r^T (resident)
            ],
            out_specs=[
                pl.BlockSpec((tile_p, c_pad), lambda i: (i, 0)),
                pl.BlockSpec((tile_p, c_pad), lambda i: (i, 0)),
            ],
        ),
        compiler_params=pltpu.CompilerParams(
            dimension_semantics=("parallel",)),
        cost_estimate=pl.CostEstimate(flops=int(proj_flops), transcendentals=0,
                                      bytes_accessed=int(proj_bytes)),
    )(x_p, wl_p, wr_p)

    # --- main aggregation kernel ---
    m_tiles = n_pad // tile_m
    k_tiles = n_pad // tile_k

    agg_flops = 2 * n_pad * n_pad * c_pad
    agg_bytes = (n_pad * n_pad * 2              # adjacency counts (bf16)
                 + m_tiles * n_pad * c_pad * 2  # z_l re-streamed per row tile
                 + n_pad * c_pad * 4            # z_r
                 + n_pad * 4 + c_pad * 4        # 1/deg + bias
                 + n_pad * c_pad * 4)           # output

    # VMEM footprint for the chosen tiles (double-buffered streams + resident
    # blocks); cap comfortably below v7x's 64 MiB physical VMEM.
    # (Resident blocks could be single-buffered via pipeline_mode=pl.Buffered(1)
    # for an extra sliver of VMEM; left out here.)
    vmem_need = (2 * tile_m * tile_k * 2        # A tiles (bf16, 2 buffers)
                 + 2 * tile_k * c_pad * 2       # z_l tiles (bf16)
                 + 2 * tile_m * c_pad * 4       # z_r
                 + 2 * tile_m * c_pad * 4       # output (resident along k)
                 + 2 * tile_m * 4 + 2 * c_pad * 4)
    vmem_limit = int(min(max(4 * vmem_need, 16 << 20), 40 << 20))

    out = pl.pallas_call(
        _sage_agg_kernel,
        out_shape=jax.ShapeDtypeStruct((n_pad, c_pad), jnp.float32),
        grid_spec=pltpu.PrefetchScalarGridSpec(
            num_scalar_prefetch=0,
            grid=(m_tiles, k_tiles),
            in_specs=[
                pl.BlockSpec((tile_m, tile_k), lambda i, k: (i, k)),  # counts
                pl.BlockSpec((tile_k, c_pad), lambda i, k: (k, 0)),   # z_l
                pl.BlockSpec((tile_m, c_pad), lambda i, k: (i, 0)),   # z_r
                pl.BlockSpec((tile_m, 1), lambda i, k: (i, 0)),       # 1/deg
                pl.BlockSpec((1, c_pad), lambda i, k: (0, 0)),        # bias
            ],
            out_specs=pl.BlockSpec((tile_m, c_pad), lambda i, k: (i, 0)),
        ),
        compiler_params=pltpu.CompilerParams(
            dimension_semantics=("parallel", "arbitrary"),
            vmem_limit_bytes=vmem_limit,
        ),
        cost_estimate=pl.CostEstimate(flops=int(agg_flops), transcendentals=0,
                                      bytes_accessed=int(agg_bytes)),
    )(a_p, zl, zr, inv_p, b_p)

    return out[:N, :C]


def reference_forward(x, edge_index, w_l, b_l, w_r):
    N = x.shape[0]
    src, dst = edge_index[0], edge_index[1]
    adj = jnp.zeros((N, N), jnp.float32).at[dst, src].add(1.0)
    deg = jnp.sum(adj, axis=1, keepdims=True)
    agg = (adj / jnp.maximum(deg, 1.0)) @ x
    out = agg @ w_l.T + b_l + x @ w_r.T
    return jnp.maximum(out, 0.0)


if __name__ == "__main__":
    key = jax.random.PRNGKey(0)
    k_x, k_wl, k_bl, k_wr, k_e = jax.random.split(key, 5)

    N = 16            # nodes
    F_in = 32         # num_features
    C = 8             # num_classes
    E = 48            # edges

    x = jax.random.normal(k_x, (N, F_in), jnp.float32)

    # deterministic synthetic parameters (shapes from SAGEConv(F_in, C)):
    #   lin_l: weight (C, F_in), bias (C,)   -- applied to aggregated neighbors
    #   lin_r: weight (C, F_in), no bias     -- applied to root node features
    w_l = jax.random.normal(k_wl, (C, F_in), jnp.float32) * 0.1
    b_l = jax.random.normal(k_bl, (C,), jnp.float32) * 0.1
    w_r = jax.random.normal(k_wr, (C, F_in), jnp.float32) * 0.1

    # deterministic edge_index: ring + random extra edges
    ring_src = jnp.arange(N, dtype=jnp.int32)
    ring_dst = (ring_src + 1) % N
    rnd = jax.random.randint(k_e, (2, E - N), 0, N, dtype=jnp.int32)
    edge_index = jnp.concatenate(
        [jnp.stack([ring_src, ring_dst]), rnd], axis=1
    )  # (2, E), row 0 = src, row 1 = dst

    out = simple_sage_forward(x, edge_index, w_l, b_l, w_r)
    out = jax.block_until_ready(out)

    ref = reference_forward(x, edge_index, w_l, b_l, w_r)
    assert out.shape == (N, C)
    # bf16 feature/count streaming with f32 accumulation -> relaxed tolerance.
    assert jnp.allclose(out, ref, atol=2e-2, rtol=2e-2), (
        float(jnp.max(jnp.abs(out - ref))))

    print("KERNEL_OK")
</pallas_src>

<mosaic_0001>
module attributes {stable_mosaic.version = 11 : i64} {
  func.func @_project_kernel(%arg0: i32, %arg1: memref<128x32xbf16, #tpu.memory_space<vmem>>, %arg2: memref<32x128xbf16, #tpu.memory_space<vmem>>, %arg3: memref<32x128xbf16, #tpu.memory_space<vmem>>, %arg4: memref<128x128xbf16, #tpu.memory_space<vmem>>, %arg5: memref<128x128xf32, #tpu.memory_space<vmem>>) attributes {dimension_semantics = [#tpu.dimension_semantics<parallel>], iteration_bounds = array<i64: 1>, scalar_prefetch = 0 : i64, scratch_operands = 0 : i64, tpu.core_type = #tpu.core_type<tc>, window_params = [{transform_indices = @transform_0, window_bounds = array<i64: 128, 32>}, {pipeline_mode = #tpu.pipeline_mode<synchronous>, transform_indices = @transform_1, window_bounds = array<i64: 32, 128>}, {pipeline_mode = #tpu.pipeline_mode<synchronous>, transform_indices = @transform_2, window_bounds = array<i64: 32, 128>}, {transform_indices = @transform_3, window_bounds = array<i64: 128, 128>}, {transform_indices = @transform_4, window_bounds = array<i64: 128, 128>}]} {
    %c0 = arith.constant 0 : index
    %c0_0 = arith.constant 0 : index
    %0 = vector.load %arg1[%c0, %c0_0] : memref<128x32xbf16, #tpu.memory_space<vmem>>, vector<128x32xbf16>
    %c0_1 = arith.constant 0 : index
    %c0_2 = arith.constant 0 : index
    %1 = vector.load %arg2[%c0_1, %c0_2] : memref<32x128xbf16, #tpu.memory_space<vmem>>, vector<32x128xbf16>
    %cst = arith.constant dense<0.000000e+00> : vector<128x128xf32>
    %2 = tpu.matmul %0, %1, %cst {dimension_numbers = #tpu.dot_dimension_numbers<[1], [0], [0], [1], [0, 0, 1, 1], [], []>} : vector<128x32xbf16>, vector<32x128xbf16>, vector<128x128xf32> -> vector<128x128xf32>
    %c0_3 = arith.constant 0 : index
    %c0_4 = arith.constant 0 : index
    %3 = vector.load %arg3[%c0_3, %c0_4] : memref<32x128xbf16, #tpu.memory_space<vmem>>, vector<32x128xbf16>
    %cst_5 = arith.constant dense<0.000000e+00> : vector<128x128xf32>
    %4 = tpu.matmul %0, %3, %cst_5 {dimension_numbers = #tpu.dot_dimension_numbers<[1], [0], [0], [1], [0, 0, 1, 1], [], []>} : vector<128x32xbf16>, vector<32x128xbf16>, vector<128x128xf32> -> vector<128x128xf32>
    %5 = arith.truncf %2 : vector<128x128xf32> to vector<128x128xbf16>
    %c0_6 = arith.constant 0 : index
    %c0_7 = arith.constant 0 : index
    %6 = vector.load %arg4[%c0_6, %c0_7] : memref<128x128xbf16, #tpu.memory_space<vmem>>, vector<128x128xbf16>
    tpu.vector_store %arg4[%c0_6, %c0_7], %5 {strides = array<i32>} : memref<128x128xbf16, #tpu.memory_space<vmem>>, vector<128x128xbf16>,
    %c0_8 = arith.constant 0 : index
    %c0_9 = arith.constant 0 : index
    %7 = vector.load %arg5[%c0_8, %c0_9] : memref<128x128xf32, #tpu.memory_space<vmem>>, vector<128x128xf32>
    tpu.vector_store %arg5[%c0_8, %c0_9], %4 {strides = array<i32>} : memref<128x128xf32, #tpu.memory_space<vmem>>, vector<128x128xf32>,
    return
  }
  func.func @transform_0(%arg0: i32) -> (i32, i32) {
    %c0_i32 = arith.constant 0 : i32
    %c0_i32_0 = arith.constant 0 : i32
    return %arg0, %c0_i32 : i32, i32
  }
  func.func @transform_1(%arg0: i32) -> (i32, i32) {
    %c0_i32 = arith.constant 0 : i32
    %c0_i32_0 = arith.constant 0 : i32
    %c0_i32_1 = arith.constant 0 : i32
    return %c0_i32, %c0_i32_0 : i32, i32
  }
  func.func @transform_2(%arg0: i32) -> (i32, i32) {
    %c0_i32 = arith.constant 0 : i32
    %c0_i32_0 = arith.constant 0 : i32
    %c0_i32_1 = arith.constant 0 : i32
    return %c0_i32, %c0_i32_0 : i32, i32
  }
  func.func @transform_3(%arg0: i32) -> (i32, i32) {
    %c0_i32 = arith.constant 0 : i32
    %c0_i32_0 = arith.constant 0 : i32
    return %arg0, %c0_i32 : i32, i32
  }
  func.func @transform_4(%arg0: i32) -> (i32, i32) {
    %c0_i32 = arith.constant 0 : i32
    %c0_i32_0 = arith.constant 0 : i32
    return %arg0, %c0_i32 : i32, i32
  }
}

</mosaic_0001>

<llo_original>
// kernel: tpu_custom_call.1
$region0: #{tpu_custom_call.1}
  #allocation0 [shape = 'u32[]', space=smem, size = 0x4, offset = 0x4, fixed_abs, tag = 'smem constant byte address 0x4 - core index']
  #allocation1 [shape = 'u32[72,128]{1,0:T(1,128)}', space=vmem, size = 0x9000, scoped, tag = 'internal scratch']
  %s0 = inlined_call_operand.vmem [shape: bf16[128,32], index: 0, kind: input, shape index: {}]
  %s1 = inlined_call_operand.vmem [shape: bf16[32,128], index: 1, kind: input, shape index: {}]
  %s2 = inlined_call_operand.vmem [shape: bf16[32,128], index: 2, kind: input, shape index: {}]
  %s3 = inlined_call_operand.hbm [shape: bf16[128,128], index: 3, kind: output, shape index: {0}]
  %s4 = inlined_call_operand.hbm [shape: f32[128,128], index: 4, kind: output, shape index: {1}]
  %5 = xla_tuple %s3, %s4
  %s6 = sld [smem:[#allocation0]]
  $region30: #{tpu_custom_call.1} parent=0
    _
  %s8 = ssub.s32 1, %s6
  %s9 = scalar_select 0, %s8, %s6
  $region1: #{tpu_custom_call.1} parent=0
    #allocation2 [shape = 'u8[32768]{0}', space=vmem, size = 0x8000, scoped, tag = 'output window, operand 0, single buffered']
    #allocation3 [shape = 's32[1]{0}', space=sflag, size = 0x4, scoped, tag = 'scoped memory for tpu_custom_call.1']
    #allocation4 [shape = 'u8[65536]{0}', space=vmem, size = 0x10000, scoped, tag = 'output window, operand 1, single buffered']
    #allocation5 [shape = 's32[1]{0}', space=sflag, size = 0x4, scoped, tag = 'scoped memory for tpu_custom_call.1']
    %10 = vsyncpa [#allocation3], 0
    %11 = vsyncpa [#allocation5], 0
    // Predicated region
    $region2: #{tpu_custom_call.1} parent=1 // pred_check
      _
    $region3: #{tpu_custom_call.1} parent=1 // pred_check_branch
      %13 = sbr.rel (0) target = $region5
    $region4: #{tpu_custom_call.1} parent=1 // pred_region
      _
    $region5: #{tpu_custom_call.1} parent=1 // pred_fallthru
      _
    // Predicated region
    $region6: #{tpu_custom_call.1} parent=1 // pred_check
      _
    $region7: #{tpu_custom_call.1} parent=1 // pred_check_branch
      %15 = sbr.rel (0) target = $region9
    $region8: #{tpu_custom_call.1} parent=1 // pred_region
      _
    $region9: #{tpu_custom_call.1} parent=1 // pred_fallthru
      _
    // Predicated region
    $region10: #{tpu_custom_call.1} parent=1 // pred_check
      _
    $region11: #{tpu_custom_call.1} parent=1 // pred_check_branch
      %17 = sbr.rel (0) target = $region13
    $region12: #{tpu_custom_call.1} parent=1 // pred_region
      _
    $region13: #{tpu_custom_call.1} parent=1 // pred_fallthru
      _
    %v19 = vld [vmem:[%s0] sm:$0xf]
    %v20 = vld [vmem:[%s0 + $0x4] sm:$0xf]
    %v21 = vld [vmem:[%s0 + $0x8] sm:$0xf]
    %v22 = vld [vmem:[%s0 + $0xc] sm:$0xf]
    %v23 = vld [vmem:[%s0 + $0x10] sm:$0xf]
    %v24 = vld [vmem:[%s0 + $0x14] sm:$0xf]
    %v25 = vld [vmem:[%s0 + $0x18] sm:$0xf]
    %v26 = vld [vmem:[%s0 + $0x1c] sm:$0xf]
    %v27 = vld [vmem:[%s0 + $0x20] sm:$0xf]
    %v28 = vld [vmem:[%s0 + $0x24] sm:$0xf]
    %v29 = vld [vmem:[%s0 + $0x28] sm:$0xf]
    %v30 = vld [vmem:[%s0 + $0x2c] sm:$0xf]
    %v31 = vld [vmem:[%s0 + $0x30] sm:$0xf]
    %v32 = vld [vmem:[%s0 + $0x34] sm:$0xf]
    %v33 = vld [vmem:[%s0 + $0x38] sm:$0xf]
    %v34 = vld [vmem:[%s0 + $0x3c] sm:$0xf]
    %v35 = vld [vmem:[%s1] sm:$0xf]
    %v36 = vld [vmem:[%s1 + $0x4] sm:$0xf]
    %v37 = vld [vmem:[%s1 + $0x8] sm:$0xf]
    %v38 = vld [vmem:[%s1 + $0xc] sm:$0xf]
    %v55 = vunpack.c.l.b16 %v19
    %v56 = vunpack.c.l.b16 %v20
    %v57 = vunpack.c.l.b16 %v21
    %v58 = vunpack.c.l.b16 %v22
    %v59 = vunpack.c.l.b16 %v23
    %v60 = vunpack.c.l.b16 %v24
    %v61 = vunpack.c.l.b16 %v25
    %v62 = vunpack.c.l.b16 %v26
    %v63 = vunpack.c.l.b16 %v27
    %v64 = vunpack.c.l.b16 %v28
    %v65 = vunpack.c.l.b16 %v29
    %v66 = vunpack.c.l.b16 %v30
    %v67 = vunpack.c.l.b16 %v31
    %v68 = vunpack.c.l.b16 %v32
    %v69 = vunpack.c.l.b16 %v33
    %v70 = vunpack.c.l.b16 %v34
    %v71 = vpack.c.b16 %v56, %v55
    %v72 = vpack.c.b16 %v58, %v57
    %v73 = vpack.c.b16 %v60, %v59
    %v74 = vpack.c.b16 %v62, %v61
    %v75 = vpack.c.b16 %v64, %v63
    %v76 = vpack.c.b16 %v66, %v65
    %v77 = vpack.c.b16 %v68, %v67
    %v78 = vpack.c.b16 %v70, %v69
    %v83 = vunpack.c.l.b16 %v35
    %v84 = vunpack.c.l.b16 %v36
    %v85 = vunpack.c.l.b16 %v37
    %v86 = vunpack.c.l.b16 %v38
    %v87 = vpack.c.b16 %v84, %v83
    %v88 = vpack.c.b16 %v86, %v85
    %vm91 = vcmask 261120
    %v93 = vsel %vm91, %v71, 0
    %v96 = vsel %vm91, %v72, 0
    %v99 = vsel %vm91, %v73, 0
    %v102 = vsel %vm91, %v74, 0
    %v105 = vsel %vm91, %v75, 0
    %v108 = vsel %vm91, %v76, 0
    %v111 = vsel %vm91, %v77, 0
    %v114 = vsel %vm91, %v78, 0
    %116 = vmatpush.bf16.msra.mxu0 0
    %117 = vmatpush.bf16.msra.mxu0 0
    %118 = vmatpush.bf16.msra.mxu0 0
    %119 = vmatpush.bf16.msra.mxu0 0
    %120 = vmatpush.bf16.msra.mxu0 0
    %121 = vmatpush.bf16.msra.mxu0 0
    %122 = vmatpush.bf16.msra.mxu0 %v88
    %123 = vmatpush.bf16.msra.mxu0 %v87
    %124 = vmatmul.bf16.gmra.mxu0 %v93
    %v125 = vpop.f32.mrf.mxu0
    %v126 = vadd.f32 0.0, %v125
    %v127 = vpop.f32.mrf.mxu0
    %v128 = vadd.f32 0.0, %v127
    %129 = vmatmul.bf16.gmra.mxu0 %v96
    %v130 = vpop.f32.mrf.mxu0
    %v131 = vadd.f32 0.0, %v130
    %v132 = vpop.f32.mrf.mxu0
    %v133 = vadd.f32 0.0, %v132
    %134 = vmatmul.bf16.gmra.mxu0 %v99
    %v135 = vpop.f32.mrf.mxu0
    %v136 = vadd.f32 0.0, %v135
    %v137 = vpop.f32.mrf.mxu0
    %v138 = vadd.f32 0.0, %v137
    %139 = vmatmul.bf16.gmra.mxu0 %v102
    %v140 = vpop.f32.mrf.mxu0
    %v141 = vadd.f32 0.0, %v140
    %v142 = vpop.f32.mrf.mxu0
    %v143 = vadd.f32 0.0, %v142
    %144 = vmatmul.bf16.gmra.mxu0 %v105
    %v145 = vpop.f32.mrf.mxu0
    %v146 = vadd.f32 0.0, %v145
    %v147 = vpop.f32.mrf.mxu0
    %v148 = vadd.f32 0.0, %v147
    %149 = vmatmul.bf16.gmra.mxu0 %v108
    %v150 = vpop.f32.mrf.mxu0
    %v151 = vadd.f32 0.0, %v150
    %v152 = vpop.f32.mrf.mxu0
    %v153 = vadd.f32 0.0, %v152
    %154 = vmatmul.bf16.gmra.mxu0 %v111
    %v155 = vpop.f32.mrf.mxu0
    %v156 = vadd.f32 0.0, %v155
    %v157 = vpop.f32.mrf.mxu0
    %v158 = vadd.f32 0.0, %v157
    %159 = vmatmul.bf16.gmra.mxu0 %v114
    %v160 = vpop.f32.mrf.mxu0
    %v161 = vadd.f32 0.0, %v160
    %v162 = vpop.f32.mrf.mxu0
    %v163 = vadd.f32 0.0, %v162
    %164 = vdwg.mxu0
    %v165 = vld [vmem:[%s2] sm:$0xf]
    %v166 = vld [vmem:[%s2 + $0x4] sm:$0xf]
    %v167 = vld [vmem:[%s2 + $0x8] sm:$0xf]
    %v168 = vld [vmem:[%s2 + $0xc] sm:$0xf]
    %v173 = vunpack.c.l.b16 %v165
    %v174 = vunpack.c.l.b16 %v166
    %v175 = vunpack.c.l.b16 %v167
    %v176 = vunpack.c.l.b16 %v168
    %v177 = vpack.c.b16 %v174, %v173
    %v178 = vpack.c.b16 %v176, %v175
    %181 = vmatpush.bf16.msra.mxu0 0
    %182 = vmatpush.bf16.msra.mxu0 0
    %183 = vmatpush.bf16.msra.mxu0 0
    %184 = vmatpush.bf16.msra.mxu0 0
    %185 = vmatpush.bf16.msra.mxu0 0
    %186 = vmatpush.bf16.msra.mxu0 0
    %187 = vmatpush.bf16.msra.mxu0 %v178
    %188 = vmatpush.bf16.msra.mxu0 %v177
    %189 = vmatmul.bf16.gmra.mxu0 %v93
    %v190 = vpop.f32.mrf.mxu0
    %v191 = vadd.f32 0.0, %v190
    %v192 = vpop.f32.mrf.mxu0
    %v193 = vadd.f32 0.0, %v192
    %194 = vmatmul.bf16.gmra.mxu0 %v96
    %v195 = vpop.f32.mrf.mxu0
    %v196 = vadd.f32 0.0, %v195
    %v197 = vpop.f32.mrf.mxu0
    %v198 = vadd.f32 0.0, %v197
    %199 = vmatmul.bf16.gmra.mxu0 %v99
    %v200 = vpop.f32.mrf.mxu0
    %v201 = vadd.f32 0.0, %v200
    %v202 = vpop.f32.mrf.mxu0
    %v203 = vadd.f32 0.0, %v202
    %204 = vmatmul.bf16.gmra.mxu0 %v102
    %v205 = vpop.f32.mrf.mxu0
    %v206 = vadd.f32 0.0, %v205
    %v207 = vpop.f32.mrf.mxu0
    %v208 = vadd.f32 0.0, %v207
    %209 = vmatmul.bf16.gmra.mxu0 %v105
    %v210 = vpop.f32.mrf.mxu0
    %v211 = vadd.f32 0.0, %v210
    %v212 = vpop.f32.mrf.mxu0
    %v213 = vadd.f32 0.0, %v212
    %214 = vmatmul.bf16.gmra.mxu0 %v108
    %v215 = vpop.f32.mrf.mxu0
    %v216 = vadd.f32 0.0, %v215
    %v217 = vpop.f32.mrf.mxu0
    %v218 = vadd.f32 0.0, %v217
    %219 = vmatmul.bf16.gmra.mxu0 %v111
    %v220 = vpop.f32.mrf.mxu0
    %v221 = vadd.f32 0.0, %v220
    %v222 = vpop.f32.mrf.mxu0
    %v223 = vadd.f32 0.0, %v222
    %224 = vmatmul.bf16.gmra.mxu0 %v114
    %v225 = vpop.f32.mrf.mxu0
    %v226 = vadd.f32 0.0, %v225
    %v227 = vpop.f32.mrf.mxu0
    %v228 = vadd.f32 0.0, %v227
    %229 = vdwg.mxu0
    %v230 = vpack.c.bf16 %v126, %v126
    %v231 = vpack.c.bf16 %v128, %v128
    %v232 = vpack.c.bf16 %v131, %v131
    %v233 = vpack.c.bf16 %v133, %v133
    %v234 = vpack.c.bf16 %v136, %v136
    %v235 = vpack.c.bf16 %v138, %v138
    %v236 = vpack.c.bf16 %v141, %v141
    %v237 = vpack.c.bf16 %v143, %v143
    %v238 = vpack.c.bf16 %v146, %v146
    %v239 = vpack.c.bf16 %v148, %v148
    %v240 = vpack.c.bf16 %v151, %v151
    %v241 = vpack.c.bf16 %v153, %v153
    %v242 = vpack.c.bf16 %v156, %v156
    %v243 = vpack.c.bf16 %v158, %v158
    %v244 = vpack.c.bf16 %v161, %v161
    %v245 = vpack.c.bf16 %v163, %v163
    %246 = vst [vmem:[#allocation2] sm:$0xf] %v230
    %247 = vst [vmem:[#allocation2 + $0x4] sm:$0xf] %v231
    %248 = vst [vmem:[#allocation2 + $0x8] sm:$0xf] %v232
    %249 = vst [vmem:[#allocation2 + $0xc] sm:$0xf] %v233
    %250 = vst [vmem:[#allocation2 + $0x10] sm:$0xf] %v234
    %251 = vst [vmem:[#allocation2 + $0x14] sm:$0xf] %v235
    %252 = vst [vmem:[#allocation2 + $0x18] sm:$0xf] %v236
    %253 = vst [vmem:[#allocation2 + $0x1c] sm:$0xf] %v237
    %254 = vst [vmem:[#allocation2 + $0x20] sm:$0xf] %v238
    %255 = vst [vmem:[#allocation2 + $0x24] sm:$0xf] %v239
    %256 = vst [vmem:[#allocation2 + $0x28] sm:$0xf] %v240
    %257 = vst [vmem:[#allocation2 + $0x2c] sm:$0xf] %v241
    %258 = vst [vmem:[#allocation2 + $0x30] sm:$0xf] %v242
    %259 = vst [vmem:[#allocation2 + $0x34] sm:$0xf] %v243
    %260 = vst [vmem:[#allocation2 + $0x38] sm:$0xf] %v244
    %261 = vst [vmem:[#allocation2 + $0x3c] sm:$0xf] %v245
    %262 = vst [vmem:[#allocation4] sm:$0xff] %v191
    %263 = vst [vmem:[#allocation4 + $0x8] sm:$0xff] %v193
    %264 = vst [vmem:[#allocation4 + $0x10] sm:$0xff] %v196
    %265 = vst [vmem:[#allocation4 + $0x18] sm:$0xff] %v198
    %266 = vst [vmem:[#allocation4 + $0x20] sm:$0xff] %v201
    %267 = vst [vmem:[#allocation4 + $0x28] sm:$0xff] %v203
    %268 = vst [vmem:[#allocation4 + $0x30] sm:$0xff] %v206
    %269 = vst [vmem:[#allocation4 + $0x38] sm:$0xff] %v208
    %270 = vst [vmem:[#allocation4 + $0x40] sm:$0xff] %v211
    %271 = vst [vmem:[#allocation4 + $0x48] sm:$0xff] %v213
    %272 = vst [vmem:[#allocation4 + $0x50] sm:$0xff] %v216
    %273 = vst [vmem:[#allocation4 + $0x58] sm:$0xff] %v218
    %274 = vst [vmem:[#allocation4 + $0x60] sm:$0xff] %v221
    %275 = vst [vmem:[#allocation4 + $0x68] sm:$0xff] %v223
    %276 = vst [vmem:[#allocation4 + $0x70] sm:$0xff] %v226
    %277 = vst [vmem:[#allocation4 + $0x78] sm:$0xff] %v228
    // Predicated region
    $region14: #{tpu_custom_call.1} parent=1 // pred_check
      _
    $region15: #{tpu_custom_call.1} parent=1 // pred_check_branch
      %279 = sbr.rel (0) target = $region17
    $region16: #{tpu_custom_call.1} parent=1 // pred_region
      %281 = vsyncadd [#allocation3], 0
      %s282 = sshll.u32 [#allocation2], 4
      %s283 = int_to_ptr.vmem [resolvable:$true] %s282
      %s284 = sshll.u32 %s3, 4
      %s285 = int_to_ptr.hbm [resolvable:$true] %s284
      %290 = dma.vmem_to_hbm [thread:$0]  %s283, 1024, %s285, [#allocation3], 64, 64, 4
    $region17: #{tpu_custom_call.1} parent=1 // pred_fallthru
      _
    // Predicated region
    $region18: #{tpu_custom_call.1} parent=1 // pred_check
      _
    $region19: #{tpu_custom_call.1} parent=1 // pred_check_branch
      %292 = sbr.rel (0) target = $region21
    $region20: #{tpu_custom_call.1} parent=1 // pred_region
      %294 = vsyncadd [#allocation5], 0
      %s295 = sshll.u32 [#allocation4], 4
      %s296 = int_to_ptr.vmem [resolvable:$true] %s295
      %s297 = sshll.u32 %s4, 4
      %s298 = int_to_ptr.hbm [resolvable:$true] %s297
      %303 = dma.vmem_to_hbm [thread:$0]  %s296, 2048, %s298, [#allocation5], 128, 128, 8
    $region21: #{tpu_custom_call.1} parent=1 // pred_fallthru
      _
    // Predicated region
    $region22: #{tpu_custom_call.1} parent=1 // pred_check
      _
    $region23: #{tpu_custom_call.1} parent=1 // pred_check_branch
      %305 = sbr.rel (0) target = $region25
    $region24: #{tpu_custom_call.1} parent=1 // pred_region
      %307 = dma.done [#allocation3], 1024
    $region25: #{tpu_custom_call.1} parent=1 // pred_fallthru
      _
    // Predicated region
    $region26: #{tpu_custom_call.1} parent=1 // pred_check
      _
    $region27: #{tpu_custom_call.1} parent=1 // pred_check_branch
      %309 = sbr.rel (0) target = $region29
    $region28: #{tpu_custom_call.1} parent=1 // pred_region
      %311 = dma.done [#allocation5], 2048
    $region29: #{tpu_custom_call.1} parent=1 // pred_fallthru
      _
    %312 = vsyncpa [#allocation3], 1
    %313 = vsyncpa [#allocation5], 1

</llo_original>
